<compile_context>
chip_gen: v7x
topology: tpu7x:2x2x1
jax: 0.10.0
libtpu: 0.0.40
codegen_flags: <defaults>
</compile_context>

<pallas_src>
import functools

import jax
import jax.numpy as jnp
import numpy as np
from jax.experimental import pallas as pl
from jax.experimental.pallas import tpu as pltpu


def eslm_kernel(x_ref, w1_ref, b1_ref, w2_ref, b2_ref, w3t_ref,
                out_ref, acc_ref, *, inv_seq):
    """Grid point (b, s): MLP on one (TILE_S, D) tile + seq-sum accumulation.

    x_ref:   (1, TILE_S, D)   current sequence tile of batch b
    w1_ref:  (D, H),  b1_ref: (1, H)
    w2_ref:  (H, H),  b2_ref: (1, H)
    w3t_ref: (1, H)           final Linear weight, transposed to a lane row
    out_ref: (1, 1, 128)      per-batch mean score broadcast across lanes
    acc_ref: (1, H) f32 VMEM scratch -- running sum of h2 over the sequence
    """
    s = pl.program_id(1)

    @pl.when(s == 0)
    def _():
        acc_ref[...] = jnp.zeros_like(acc_ref)

    x = x_ref[0]                                                      # (TILE_S, D)

    # MLP hidden layers (MXU matmuls, f32 accumulation) + VPU bias/ReLU.
    h1 = jnp.maximum(
        jnp.dot(x, w1_ref[...], preferred_element_type=jnp.float32)
        + b1_ref[...], 0.0)                                           # (TILE_S, H)
    h2 = jnp.maximum(
        jnp.dot(h1, w2_ref[...], preferred_element_type=jnp.float32)
        + b2_ref[...], 0.0)                                           # (TILE_S, H)

    # Partial sum over the sequence rows of this tile (sublane reduction, XLU).
    acc_ref[...] += jnp.sum(h2, axis=0, keepdims=True)                # (1, H)

    @pl.when(s == pl.num_programs(1) - 1)
    def _():
        pooled = acc_ref[...] * inv_seq                               # (1, H) seq-mean
        # Final Linear (H -> 1) applied after pooling (exact by linearity);
        # VPU multiply + lane reduction instead of a lane-width-1 MXU call.
        val = jnp.sum(pooled * w3t_ref[...], axis=-1, keepdims=True)  # (1, 1)
        out_ref[0] = jnp.broadcast_to(val, (1, 128))                  # lane-dense store


def eslm_pallas(encoder_output, params, *, seq_tile=128):
    """encoder_output: (B, S, D) float32 -> (B, 1) float32 (softmax over batch)."""
    B, S, D = encoder_output.shape
    H = params["w1"].shape[1]

    tile_s = min(seq_tile, S)
    assert S % tile_s == 0, "seq length must be divisible by the sequence tile"
    num_s = S // tile_s

    w3t = params["w3"].reshape(1, H)       # (H, 1) -> (1, H) lane row
    kernel = functools.partial(eslm_kernel, inv_seq=1.0 / S)

    grid_spec = pltpu.PrefetchScalarGridSpec(
        num_scalar_prefetch=0,
        grid=(B, num_s),
        in_specs=[
            # streamed activation tile
            pl.BlockSpec((1, tile_s, D), lambda b, s: (b, s, 0)),
            # VMEM-resident weights / biases (constant index_map -> fetched once)
            pl.BlockSpec((D, H), lambda b, s: (0, 0)),
            pl.BlockSpec((1, H), lambda b, s: (0, 0)),
            pl.BlockSpec((H, H), lambda b, s: (0, 0)),
            pl.BlockSpec((1, H), lambda b, s: (0, 0)),
            pl.BlockSpec((1, H), lambda b, s: (0, 0)),
        ],
        out_specs=pl.BlockSpec((1, 1, 128), lambda b, s: (b, 0, 0)),
        scratch_shapes=[pltpu.VMEM((1, H), jnp.float32)],
    )

    out_lanes = pl.pallas_call(
        kernel,
        out_shape=jax.ShapeDtypeStruct((B, 1, 128), jnp.float32),
        grid_spec=grid_spec,
        compiler_params=pltpu.CompilerParams(
            dimension_semantics=("parallel", "arbitrary"),
            vmem_limit_bytes=32 * 1024 * 1024),
    )(encoder_output,
      params["w1"], params["b1"],
      params["w2"], params["b2"],
      w3t)

    # Per-batch mean score; add the final bias (same constant for every batch,
    # so it cancels in the softmax, kept for fidelity) and softmax over batch.
    mean_b = out_lanes[:, 0, :1] + params["b3"]                       # (B, 1)
    return jax.nn.softmax(mean_b, axis=0)


def eslm_ref(encoder_output, params):
    """Plain-JAX reference of the *full* PyTorch forward (including the
    identity attention branch) — proves the algebraic simplifications exact."""
    a = encoder_output @ params["wa"] + params["ba"]                  # (B, S, 1)
    attn = jax.nn.softmax(a, axis=-1)                                 # all ones
    c = attn * encoder_output
    h1 = jax.nn.relu(c @ params["w1"] + params["b1"])
    h2 = jax.nn.relu(h1 @ params["w2"] + params["b2"])
    s = h2 @ params["w3"] + params["b3"]                              # (B, S, 1)
    m = jnp.mean(s, axis=1)                                           # (B, 1)
    return jax.nn.softmax(m, axis=0)


def init_params(key, feat_dim, mlp_hidden_dim):
    """Deterministic synthetic parameters (PyTorch-Linear-like uniform init)."""
    def linear(k, fan_in, fan_out):
        k1, k2 = jax.random.split(k)
        bound = 1.0 / np.sqrt(fan_in)
        w = jax.random.uniform(k1, (fan_in, fan_out), jnp.float32, -bound, bound)
        b = jax.random.uniform(k2, (1, fan_out), jnp.float32, -bound, bound)
        return w, b

    ks = jax.random.split(key, 5)
    # self.attention: kept for fidelity; not fed to the kernel (softmax over a
    # size-1 axis makes this branch an exact identity in the forward pass).
    wa, ba = linear(ks[0], feat_dim, 1)
    w1, b1 = linear(ks[1], feat_dim, mlp_hidden_dim)                  # mlp[0]
    w2, b2 = linear(ks[2], mlp_hidden_dim, mlp_hidden_dim)            # mlp[2]
    w3, b3 = linear(ks[3], mlp_hidden_dim, 1)                         # mlp[4]
    # self.regression exists in __init__ but is unused in forward; kept for fidelity.
    wr, br = linear(ks[4], feat_dim, 1)
    return {"wa": wa, "ba": ba, "w1": w1, "b1": b1, "w2": w2, "b2": b2,
            "w3": w3, "b3": b3, "wr": wr, "br": br}


if __name__ == "__main__":
    B, S, D, H = 2, 16, 128, 128     # batch, seq, feat_dim, mlp_hidden_dim (small)
    VOCAB = 100

    key = jax.random.PRNGKey(0)
    k_emb, k_ids, k_par = jax.random.split(key, 3)

    # Synthetic deterministic "LM encoder": embedding lookup, masked-token zeroing.
    embedding = jax.random.normal(k_emb, (VOCAB, D), jnp.float32) * 0.02
    input_ids = jax.random.randint(k_ids, (B, S), 0, VOCAB)
    attention_mask = jnp.ones((B, S), jnp.float32).at[:, S - 2:].set(0.0)  # pad last 2
    encoder_output = embedding[input_ids] * attention_mask[..., None]      # (B, S, D)

    params = init_params(k_par, D, H)

    # seq_tile=8 exercises the multi-tile sequence accumulation path.
    out = eslm_pallas(encoder_output, params, seq_tile=8)
    out = jax.block_until_ready(out)

    ref = eslm_ref(encoder_output, params)
    np.testing.assert_allclose(np.asarray(out), np.asarray(ref), rtol=1e-5, atol=1e-5)
    assert out.shape == (B, 1)

    print("KERNEL_OK")
</pallas_src>

<mosaic_0001>
module attributes {stable_mosaic.version = 11 : i64} {
  func.func @eslm_kernel(%arg0: i32, %arg1: i32, %arg2: memref<1x8x128xf32, #tpu.memory_space<vmem>>, %arg3: memref<128x128xf32, #tpu.memory_space<vmem>>, %arg4: memref<1x128xf32, #tpu.memory_space<vmem>>, %arg5: memref<128x128xf32, #tpu.memory_space<vmem>>, %arg6: memref<1x128xf32, #tpu.memory_space<vmem>>, %arg7: memref<1x128xf32, #tpu.memory_space<vmem>>, %arg8: memref<1x1x128xf32, #tpu.memory_space<vmem>>, %arg9: memref<1x128xf32, #tpu.memory_space<vmem>>) attributes {dimension_semantics = [#tpu.dimension_semantics<parallel>, #tpu.dimension_semantics<arbitrary>], iteration_bounds = array<i64: 2, 2>, scalar_prefetch = 0 : i64, scratch_operands = 1 : i64, tpu.core_type = #tpu.core_type<tc>, window_params = [{transform_indices = @transform_0, window_bounds = array<i64: 1, 8, 128>}, {pipeline_mode = #tpu.pipeline_mode<synchronous>, transform_indices = @transform_1, window_bounds = array<i64: 128, 128>}, {pipeline_mode = #tpu.pipeline_mode<synchronous>, transform_indices = @transform_2, window_bounds = array<i64: 1, 128>}, {pipeline_mode = #tpu.pipeline_mode<synchronous>, transform_indices = @transform_3, window_bounds = array<i64: 128, 128>}, {pipeline_mode = #tpu.pipeline_mode<synchronous>, transform_indices = @transform_4, window_bounds = array<i64: 1, 128>}, {pipeline_mode = #tpu.pipeline_mode<synchronous>, transform_indices = @transform_5, window_bounds = array<i64: 1, 128>}, {transform_indices = @transform_6, window_bounds = array<i64: 1, 1, 128>}]} {
    %c0_i32 = arith.constant 0 : i32
    %0 = arith.cmpi eq, %arg1, %c0_i32 : i32
    %1 = arith.extui %0 : i1 to i32
    %c0_i32_0 = arith.constant 0 : i32
    %2 = arith.cmpi ne, %1, %c0_i32_0 : i32
    scf.if %2 {
      %cst_20 = arith.constant 0.000000e+00 : f32
      %27 = vector.broadcast %cst_20 : f32 to vector<1x128xf32>
      %c0_21 = arith.constant 0 : index
      %c0_22 = arith.constant 0 : index
      %28 = vector.load %arg9[%c0_21, %c0_22] : memref<1x128xf32, #tpu.memory_space<vmem>>, vector<1x128xf32>
      tpu.vector_store %arg9[%c0_21, %c0_22], %27 {strides = array<i32>} : memref<1x128xf32, #tpu.memory_space<vmem>>, vector<1x128xf32>,
    } else {
    }
    %c0 = arith.constant 0 : index
    %c0_1 = arith.constant 0 : index
    %c0_2 = arith.constant 0 : index
    %3 = vector.load %arg2[%c0, %c0_1, %c0_2] : memref<1x8x128xf32, #tpu.memory_space<vmem>>, vector<1x8x128xf32>
    %4 = vector.shape_cast %3 : vector<1x8x128xf32> to vector<8x128xf32>
    %c0_3 = arith.constant 0 : index
    %c0_4 = arith.constant 0 : index
    %5 = vector.load %arg3[%c0_3, %c0_4] : memref<128x128xf32, #tpu.memory_space<vmem>>, vector<128x128xf32>
    %cst = arith.constant dense<0.000000e+00> : vector<8x128xf32>
    %6 = tpu.matmul %4, %5, %cst {dimension_numbers = #tpu.dot_dimension_numbers<[1], [0], [0], [1], [0, 0, 1, 1], [], []>} : vector<8x128xf32>, vector<128x128xf32>, vector<8x128xf32> -> vector<8x128xf32>
    %c0_5 = arith.constant 0 : index
    %c0_6 = arith.constant 0 : index
    %7 = vector.load %arg4[%c0_5, %c0_6] : memref<1x128xf32, #tpu.memory_space<vmem>>, vector<1x128xf32>
    %8 = vector.broadcast %7 : vector<1x128xf32> to vector<8x128xf32>
    %9 = arith.addf %6, %8 : vector<8x128xf32>
    %cst_7 = arith.constant 0.000000e+00 : f32
    %10 = vector.broadcast %cst_7 : f32 to vector<8x128xf32>
    %11 = arith.maximumf %9, %10 : vector<8x128xf32>
    %c0_8 = arith.constant 0 : index
    %c0_9 = arith.constant 0 : index
    %12 = vector.load %arg5[%c0_8, %c0_9] : memref<128x128xf32, #tpu.memory_space<vmem>>, vector<128x128xf32>
    %cst_10 = arith.constant dense<0.000000e+00> : vector<8x128xf32>
    %13 = tpu.matmul %11, %12, %cst_10 {dimension_numbers = #tpu.dot_dimension_numbers<[1], [0], [0], [1], [0, 0, 1, 1], [], []>} : vector<8x128xf32>, vector<128x128xf32>, vector<8x128xf32> -> vector<8x128xf32>
    %c0_11 = arith.constant 0 : index
    %c0_12 = arith.constant 0 : index
    %14 = vector.load %arg6[%c0_11, %c0_12] : memref<1x128xf32, #tpu.memory_space<vmem>>, vector<1x128xf32>
    %15 = vector.broadcast %14 : vector<1x128xf32> to vector<8x128xf32>
    %16 = arith.addf %13, %15 : vector<8x128xf32>
    %cst_13 = arith.constant 0.000000e+00 : f32
    %17 = vector.broadcast %cst_13 : f32 to vector<8x128xf32>
    %18 = arith.maximumf %16, %17 : vector<8x128xf32>
    %c0_14 = arith.constant 0 : index
    %c0_15 = arith.constant 0 : index
    %19 = vector.load %arg9[%c0_14, %c0_15] : memref<1x128xf32, #tpu.memory_space<vmem>>, vector<1x128xf32>
    %cst_16 = arith.constant dense<0.000000e+00> : vector<128xf32>
    %20 = vector.multi_reduction <add>, %18, %cst_16 [0] : vector<8x128xf32> to vector<128xf32>
    %21 = vector.shape_cast %20 : vector<128xf32> to vector<1x128xf32>
    %22 = arith.addf %19, %21 : vector<1x128xf32>
    %c0_17 = arith.constant 0 : index
    %c0_18 = arith.constant 0 : index
    %23 = vector.load %arg9[%c0_17, %c0_18] : memref<1x128xf32, #tpu.memory_space<vmem>>, vector<1x128xf32>
    tpu.vector_store %arg9[%c0_17, %c0_18], %22 {strides = array<i32>} : memref<1x128xf32, #tpu.memory_space<vmem>>, vector<1x128xf32>,
    %c1_i32 = arith.constant 1 : i32
    %24 = arith.cmpi eq, %arg1, %c1_i32 : i32
    %25 = arith.extui %24 : i1 to i32
    %c0_i32_19 = arith.constant 0 : i32
    %26 = arith.cmpi ne, %25, %c0_i32_19 : i32
    scf.if %26 {
      %c0_20 = arith.constant 0 : index
      %c0_21 = arith.constant 0 : index
      %27 = vector.load %arg9[%c0_20, %c0_21] : memref<1x128xf32, #tpu.memory_space<vmem>>, vector<1x128xf32>
      %cst_22 = arith.constant 6.250000e-02 : f32
      %28 = vector.broadcast %cst_22 : f32 to vector<1x128xf32>
      %29 = arith.mulf %27, %28 : vector<1x128xf32>
      %c0_23 = arith.constant 0 : index
      %c0_24 = arith.constant 0 : index
      %30 = vector.load %arg7[%c0_23, %c0_24] : memref<1x128xf32, #tpu.memory_space<vmem>>, vector<1x128xf32>
      %31 = arith.mulf %29, %30 : vector<1x128xf32>
      %cst_25 = arith.constant dense<0.000000e+00> : vector<1xf32>
      %32 = vector.multi_reduction <add>, %31, %cst_25 [1] : vector<1x128xf32> to vector<1xf32>
      %33 = vector.shape_cast %32 : vector<1xf32> to vector<1x1xf32>
      %34 = vector.shape_cast %33 : vector<1x1xf32> to vector<1x1xf32>
      %35 = vector.broadcast %34 : vector<1x1xf32> to vector<1x128xf32>
      %c0_26 = arith.constant 0 : index
      %c0_27 = arith.constant 0 : index
      %c0_28 = arith.constant 0 : index
      %36 = vector.load %arg8[%c0_26, %c0_27, %c0_28] : memref<1x1x128xf32, #tpu.memory_space<vmem>>, vector<1x1x128xf32>
      %37 = vector.shape_cast %36 : vector<1x1x128xf32> to vector<1x128xf32>
      %38 = vector.shape_cast %35 : vector<1x128xf32> to vector<1x1x128xf32>
      tpu.vector_store %arg8[%c0_26, %c0_27, %c0_28], %38 {strides = array<i32>} : memref<1x1x128xf32, #tpu.memory_space<vmem>>, vector<1x1x128xf32>,
    } else {
    }
    return
  }
  func.func @transform_0(%arg0: i32, %arg1: i32) -> (i32, i32, i32) {
    %c0_i32 = arith.constant 0 : i32
    %c0_i32_0 = arith.constant 0 : i32
    return %arg0, %arg1, %c0_i32 : i32, i32, i32
  }
  func.func @transform_1(%arg0: i32, %arg1: i32) -> (i32, i32) {
    %c0_i32 = arith.constant 0 : i32
    %c0_i32_0 = arith.constant 0 : i32
    %c0_i32_1 = arith.constant 0 : i32
    return %c0_i32, %c0_i32_0 : i32, i32
  }
  func.func @transform_2(%arg0: i32, %arg1: i32) -> (i32, i32) {
    %c0_i32 = arith.constant 0 : i32
    %c0_i32_0 = arith.constant 0 : i32
    %c0_i32_1 = arith.constant 0 : i32
    return %c0_i32, %c0_i32_0 : i32, i32
  }
  func.func @transform_3(%arg0: i32, %arg1: i32) -> (i32, i32) {
    %c0_i32 = arith.constant 0 : i32
    %c0_i32_0 = arith.constant 0 : i32
    %c0_i32_1 = arith.constant 0 : i32
    return %c0_i32, %c0_i32_0 : i32, i32
  }
  func.func @transform_4(%arg0: i32, %arg1: i32) -> (i32, i32) {
    %c0_i32 = arith.constant 0 : i32
    %c0_i32_0 = arith.constant 0 : i32
    %c0_i32_1 = arith.constant 0 : i32
    return %c0_i32, %c0_i32_0 : i32, i32
  }
  func.func @transform_5(%arg0: i32, %arg1: i32) -> (i32, i32) {
    %c0_i32 = arith.constant 0 : i32
    %c0_i32_0 = arith.constant 0 : i32
    %c0_i32_1 = arith.constant 0 : i32
    return %c0_i32, %c0_i32_0 : i32, i32
  }
  func.func @transform_6(%arg0: i32, %arg1: i32) -> (i32, i32, i32) {
    %c0_i32 = arith.constant 0 : i32
    %c0_i32_0 = arith.constant 0 : i32
    %c0_i32_1 = arith.constant 0 : i32
    return %arg0, %c0_i32, %c0_i32_0 : i32, i32, i32
  }
}

</mosaic_0001>

<llo_original>
// kernel: tpu_custom_call.1
$region0: #{tpu_custom_call.1}
  #allocation0 [shape = 'u32[]', space=smem, size = 0x4, offset = 0x4, fixed_abs, tag = 'smem constant byte address 0x4 - core index']
  #allocation1 [shape = 'u32[144,128]{1,0:T(1,128)}', space=vmem, size = 0x12000, scoped, tag = 'internal scratch']
  #allocation2 [shape = 'f32[1,128]{1,0:T(1,128)}', space=vmem, size = 0x200, scoped, tag = 'scratch operand']
  %s0 = inlined_call_operand.hbm [shape: f32[2,16,128], index: 0, kind: input, shape index: {}]
  %s1 = inlined_call_operand.hbm [shape: f32[128,128], index: 1, kind: input, shape index: {}]
  %s2 = inlined_call_operand.vmem [shape: f32[1,128], index: 2, kind: input, shape index: {}]
  %s3 = inlined_call_operand.hbm [shape: f32[128,128], index: 3, kind: input, shape index: {}]
  %s4 = inlined_call_operand.vmem [shape: f32[1,128], index: 4, kind: input, shape index: {}]
  %s5 = inlined_call_operand.vmem [shape: f32[1,128], index: 5, kind: input, shape index: {}]
  %s6 = inlined_call_operand.hbm [shape: f32[2,1,128], index: 6, kind: output, shape index: {}]
  %s7 = sld [smem:[#allocation0]]
  $region77: #{tpu_custom_call.1} parent=0
    _
  %s9 = ssub.s32 1, %s7
  %s10 = scalar_select 0, %s9, %s7
  $region1: #{tpu_custom_call.1} parent=0
    #allocation3 [shape = 'u8[8192]{0}', space=vmem, size = 0x2000, scoped, tag = 'input window, operand 0']
    #allocation4 [shape = 's32[2]{0}', space=sflag, size = 0x8, scoped, tag = 'scoped memory for tpu_custom_call.1']
    #allocation5 [shape = 's32[2]{0}', space=sflag, size = 0x8, scoped, tag = 'scoped memory for tpu_custom_call.1']
    #allocation6 [shape = 'u8[65536]{0}', space=vmem, size = 0x10000, scoped, tag = 'input window, operand 1, single buffered']
    #allocation7 [shape = 's32[1]{0}', space=sflag, size = 0x4, scoped, tag = 'scoped memory for tpu_custom_call.1']
    #allocation8 [shape = 'u8[65536]{0}', space=vmem, size = 0x10000, scoped, tag = 'input window, operand 3, single buffered']
    #allocation9 [shape = 'u8[1024]{0}', space=vmem, size = 0x400, scoped, tag = 'output window, operand 0']
    %11 = vsyncpa [#allocation4], 0
    %s12 = scalar_lea.sflag [#allocation4], 1
    %13 = vsyncpa %s12, 0
    %14 = vsyncpa [#allocation7], 0
    %15 = vsyncpa [#allocation5], 0
    %s16 = scalar_lea.sflag [#allocation5], 1
    %17 = vsyncpa %s16, 0
    loop: start=0, step=1, limit=6
    $region2: #{tpu_custom_call.1} parent=1 // loop_pre_header
      _
    $region3: #{tpu_custom_call.1} parent=1 // loop_header
      %s19 = sphi 0, %s23
      %p20 = scmp.ge.s32.totalorder %s19, 6
      %s26 = sphi 0, %s38
      %s27 = sphi 0, %s34
      %s28 = sphi 0, %s26
      %s29 = sphi 0, %s27
      %s30 = sphi 0, %s28
      %s31 = sphi 0, %s29
      %s43 = sphi 0, %s45
      %s46 = sphi 0, %s43
      %s47 = sphi 0, %s46
      %s63 = sphi 0, %s47
      %s67 = sphi 0, %s67
      %s69 = sphi 0, %s67
      %s70 = sphi 0, %s69
      %s84 = sphi 0, %s70
      %s88 = sphi 0, %s88
      %s90 = sphi 0, %s88
      %s91 = sphi 0, %s90
      %s105 = sphi 0, %s91
      %s109 = sphi 0, %s109
      %s111 = sphi 0, %s109
      %s112 = sphi 0, %s111
      %s126 = sphi 0, %s112
      %s130 = sphi 0, %s130
      %s132 = sphi 0, %s130
      %s133 = sphi 0, %s132
      %s147 = sphi 0, %s133
      %s151 = sphi 0, %s151
      %s153 = sphi 0, %s151
      %s154 = sphi 0, %s153
      %s168 = sphi 0, %s154
      %s174 = sphi 0, %s176
      %s177 = sphi 0, %s174
      %s178 = sphi 0, %s177
      %s194 = sphi 0, %s178
    $region4: #{tpu_custom_call.1} parent=1 // loop_header_branch
      %22 = sbr.rel (%p20) target = $region8
    $region5: #{tpu_custom_call.1} parent=1 // loop_body
      %s24 = ssub.s32 %s19, 1
      %s25 = ssub.s32 %s19, 2
      %s32 = sadd.s32 1, %s27
      %p33 = scmp.ge.s32.totalorder %s32, 2
      %s34 = scalar_select %p33, 0, %s32
      %s35 = sadd.s32 1, %s26
      %s36 = scalar_select %p33, %s35, %s26
      %p37 = scmp.ge.s32.totalorder %s36, 2
      %s38 = scalar_select %p37, 0, %s36
      %s39 = ssub.s32 %s26, %s38
      %s40 = ssub.s32 %s27, %s34
      %s41 = sor.u32 %s39, %s40
      %p42 = scmp.eq.s32.totalorder %s41, 0
      %s44 = sadd.s32 %s43, 1
      %s45 = scalar_select %p42, %s43, %s44
      %p48 = pneg %p42
      %p49 = scmp.eq.s32.totalorder %s19, 3
      %p50 = por %p48, %p49
      %p51 = scmp.ne.s32.totalorder %s43, %s46
      %p52 = scmp.eq.s32.totalorder %s19, 0
      %p53 = por %p51, %p52
      %p54 = scmp.ne.s32.totalorder %s43, %s46
      %p55 = scmp.eq.s32.totalorder %s24, 3
      %p56 = por %p54, %p55
      %p57 = scmp.ne.s32.totalorder %s46, %s47
      %p58 = scmp.eq.s32.totalorder %s24, 0
      %p59 = por %p57, %p58
      %p60 = scmp.ne.s32.totalorder %s46, %s47
      %p61 = scmp.eq.s32.totalorder %s25, 3
      %p62 = por %p60, %p61
      %p64 = scmp.ne.s32.totalorder %s47, %s63
      %p65 = scmp.eq.s32.totalorder %s25, 0
      %p66 = por %p64, %p65
      %s68 = sadd.s32 %s67, 1
      %p71 = scmp.eq.s32.totalorder %s19, 3
      %p72 = scmp.ne.s32.totalorder %s67, %s69
      %p73 = scmp.eq.s32.totalorder %s19, 0
      %p74 = por %p72, %p73
      %p75 = scmp.ne.s32.totalorder %s67, %s69
      %p76 = scmp.eq.s32.totalorder %s24, 3
      %p77 = por %p75, %p76
      %p78 = scmp.ne.s32.totalorder %s69, %s70
      %p79 = scmp.eq.s32.totalorder %s24, 0
      %p80 = por %p78, %p79
      %p81 = scmp.ne.s32.totalorder %s69, %s70
      %p82 = scmp.eq.s32.totalorder %s25, 3
      %p83 = por %p81, %p82
      %p85 = scmp.ne.s32.totalorder %s70, %s84
      %p86 = scmp.eq.s32.totalorder %s25, 0
      %p87 = por %p85, %p86
      %s89 = sadd.s32 %s88, 1
      %p92 = scmp.eq.s32.totalorder %s19, 3
      %p93 = scmp.ne.s32.totalorder %s88, %s90
      %p94 = scmp.eq.s32.totalorder %s19, 0
      %p95 = por %p93, %p94
      %p96 = scmp.ne.s32.totalorder %s88, %s90
      %p97 = scmp.eq.s32.totalorder %s24, 3
      %p98 = por %p96, %p97
      %p99 = scmp.ne.s32.totalorder %s90, %s91
      %p100 = scmp.eq.s32.totalorder %s24, 0
      %p101 = por %p99, %p100
      %p102 = scmp.ne.s32.totalorder %s90, %s91
      %p103 = scmp.eq.s32.totalorder %s25, 3
      %p104 = por %p102, %p103
      %p106 = scmp.ne.s32.totalorder %s91, %s105
      %p107 = scmp.eq.s32.totalorder %s25, 0
      %p108 = por %p106, %p107
      %s110 = sadd.s32 %s109, 1
      %p113 = scmp.eq.s32.totalorder %s19, 3
      %p114 = scmp.ne.s32.totalorder %s109, %s111
      %p115 = scmp.eq.s32.totalorder %s19, 0
      %p116 = por %p114, %p115
      %p117 = scmp.ne.s32.totalorder %s109, %s111
      %p118 = scmp.eq.s32.totalorder %s24, 3
      %p119 = por %p117, %p118
      %p120 = scmp.ne.s32.totalorder %s111, %s112
      %p121 = scmp.eq.s32.totalorder %s24, 0
      %p122 = por %p120, %p121
      %p123 = scmp.ne.s32.totalorder %s111, %s112
      %p124 = scmp.eq.s32.totalorder %s25, 3
      %p125 = por %p123, %p124
      %p127 = scmp.ne.s32.totalorder %s112, %s126
      %p128 = scmp.eq.s32.totalorder %s25, 0
      %p129 = por %p127, %p128
      %s131 = sadd.s32 %s130, 1
      %p134 = scmp.eq.s32.totalorder %s19, 3
      %p135 = scmp.ne.s32.totalorder %s130, %s132
      %p136 = scmp.eq.s32.totalorder %s19, 0
      %p137 = por %p135, %p136
      %p138 = scmp.ne.s32.totalorder %s130, %s132
      %p139 = scmp.eq.s32.totalorder %s24, 3
      %p140 = por %p138, %p139
      %p141 = scmp.ne.s32.totalorder %s132, %s133
      %p142 = scmp.eq.s32.totalorder %s24, 0
      %p143 = por %p141, %p142
      %p144 = scmp.ne.s32.totalorder %s132, %s133
      %p145 = scmp.eq.s32.totalorder %s25, 3
      %p146 = por %p144, %p145
      %p148 = scmp.ne.s32.totalorder %s133, %s147
      %p149 = scmp.eq.s32.totalorder %s25, 0
      %p150 = por %p148, %p149
      %s152 = sadd.s32 %s151, 1
      %p155 = scmp.eq.s32.totalorder %s19, 3
      %p156 = scmp.ne.s32.totalorder %s151, %s153
      %p157 = scmp.eq.s32.totalorder %s19, 0
      %p158 = por %p156, %p157
      %p159 = scmp.ne.s32.totalorder %s151, %s153
      %p160 = scmp.eq.s32.totalorder %s24, 3
      %p161 = por %p159, %p160
      %p162 = scmp.ne.s32.totalorder %s153, %s154
      %p163 = scmp.eq.s32.totalorder %s24, 0
      %p164 = por %p162, %p163
      %p165 = scmp.ne.s32.totalorder %s153, %s154
      %p166 = scmp.eq.s32.totalorder %s25, 3
      %p167 = por %p165, %p166
      %p169 = scmp.ne.s32.totalorder %s154, %s168
      %p170 = scmp.eq.s32.totalorder %s25, 0
      %p171 = por %p169, %p170
      %s172 = ssub.s32 %s26, %s38
      %p173 = scmp.eq.s32.totalorder %s172, 0
      %s175 = sadd.s32 %s174, 1
      %s176 = scalar_select %p173, %s174, %s175
      %p179 = pneg %p173
      %p180 = scmp.eq.s32.totalorder %s19, 3
      %p181 = por %p179, %p180
      %p182 = scmp.ne.s32.totalorder %s174, %s177
      %p183 = scmp.eq.s32.totalorder %s19, 0
      %p184 = por %p182, %p183
      %p185 = scmp.ne.s32.totalorder %s174, %s177
      %p186 = scmp.eq.s32.totalorder %s24, 3
      %p187 = por %p185, %p186
      %p188 = scmp.ne.s32.totalorder %s177, %s178
      %p189 = scmp.eq.s32.totalorder %s24, 0
      %p190 = por %p188, %p189
      %p191 = scmp.ne.s32.totalorder %s177, %s178
      %p192 = scmp.eq.s32.totalorder %s25, 3
      %p193 = por %p191, %p192
      %p195 = scmp.ne.s32.totalorder %s178, %s194
      %p196 = scmp.eq.s32.totalorder %s25, 0
      %p197 = por %p195, %p196
      %p198 = scmp.le.s32.totalorder 1, %s19
      %p199 = scmp.lt.s32.totalorder %s19, 5
      %p200 = pnand %p198, %p199
      %p201 = pneg %p200
      // Predicated region
      $region9: #{tpu_custom_call.1} parent=5 // pred_check
        _
      $region10: #{tpu_custom_call.1} parent=5 // pred_check_branch
        %203 = sbr.rel (%p200) target = $region12
      $region11: #{tpu_custom_call.1} parent=5 // pred_region
        %s204 = ssub.s32 %s19, 1
        // Predicated region
        $region13: #{tpu_custom_call.1} parent=11 // pred_check
          %p205 = pneg %p80
        $region14: #{tpu_custom_call.1} parent=11 // pred_check_branch
          %207 = sbr.rel (%p205) target = $region16
        $region15: #{tpu_custom_call.1} parent=11 // pred_region
          %s209 = ssub.s32 2048, 2048
          %210 = vsyncadd [#allocation7], %s209
          %s211 = sshll.u32 [#allocation6], 4
          %s212 = int_to_ptr.vmem [resolvable:$true] %s211
          %217 = dma.hbm_to_vmem [thread:$0]  %s1, 2048, %s212, [#allocation7], 128, 128, 8
        $region16: #{tpu_custom_call.1} parent=11 // pred_fallthru
          _
        // Predicated region
        $region17: #{tpu_custom_call.1} parent=11 // pred_check
          %p218 = pneg %p101
        $region18: #{tpu_custom_call.1} parent=11 // pred_check_branch
          %220 = sbr.rel (%p218) target = $region20
        $region19: #{tpu_custom_call.1} parent=11 // pred_region
          _
        $region20: #{tpu_custom_call.1} parent=11 // pred_fallthru
          _
        // Predicated region
        $region21: #{tpu_custom_call.1} parent=11 // pred_check
          %p221 = pneg %p122
        $region22: #{tpu_custom_call.1} parent=11 // pred_check_branch
          %223 = sbr.rel (%p221) target = $region24
        $region23: #{tpu_custom_call.1} parent=11 // pred_region
          %s225 = ssub.s32 2048, 2048
          %226 = vsyncadd [#allocation7], %s225
          %s227 = sshll.u32 [#allocation8], 4
          %s228 = int_to_ptr.vmem [resolvable:$true] %s227
          %233 = dma.hbm_to_vmem [thread:$0]  %s3, 2048, %s228, [#allocation7], 128, 128, 8
        $region24: #{tpu_custom_call.1} parent=11 // pred_fallthru
          _
        // Predicated region
        $region25: #{tpu_custom_call.1} parent=11 // pred_check
          %p234 = pneg %p143
        $region26: #{tpu_custom_call.1} parent=11 // pred_check_branch
          %236 = sbr.rel (%p234) target = $region28
        $region27: #{tpu_custom_call.1} parent=11 // pred_region
          _
        $region28: #{tpu_custom_call.1} parent=11 // pred_fallthru
          _
        // Predicated region
        $region29: #{tpu_custom_call.1} parent=11 // pred_check
          %p237 = pneg %p164
        $region30: #{tpu_custom_call.1} parent=11 // pred_check_branch
          %239 = sbr.rel (%p237) target = $region32
        $region31: #{tpu_custom_call.1} parent=11 // pred_region
          _
        $region32: #{tpu_custom_call.1} parent=11 // pred_fallthru
          _
      $region12: #{tpu_custom_call.1} parent=5 // pred_fallthru
        _
      %p240 = scmp.lt.s32.totalorder %s19, 4
      // Predicated region
      $region33: #{tpu_custom_call.1} parent=5 // pred_check
        %p241 = pneg %p240
      $region34: #{tpu_custom_call.1} parent=5 // pred_check_branch
        %243 = sbr.rel (%p241) target = $region36
      $region35: #{tpu_custom_call.1} parent=5 // pred_region
        // Predicated region
        $region37: #{tpu_custom_call.1} parent=35 // pred_check
          %p244 = pneg %p53
        $region38: #{tpu_custom_call.1} parent=35 // pred_check_branch
          %246 = sbr.rel (%p244) target = $region40
        $region39: #{tpu_custom_call.1} parent=35 // pred_region
          %s247 = sand.u32 %s43, 1
          %s248 = scalar_lea.sflag [#allocation4], %s247
          %s249 = sand.u32 %s43, 1
          %s250 = smul.addr %s249, 8
          %s251 = scalar_lea.vmem [#allocation3], %s250
          %s253 = ssub.s32 128, 128
          %254 = vsyncadd %s248, %s253
          %s255 = smul.addr %s26, 2
          %s256 = sadd.s32 %s27, %s255
          %s257 = smul.addr %s256, 128
          %s258 = scalar_lea.hbm %s0, %s257
          %s260 = sshll.u32 %s251, 4
          %s261 = int_to_ptr.vmem [resolvable:$true] %s260
          %263 = dma.hbm_to_vmem [thread:$0]  %s258, 128, %s261, %s248
        $region40: #{tpu_custom_call.1} parent=35 // pred_fallthru
          _
      $region36: #{tpu_custom_call.1} parent=5 // pred_fallthru
        _
      %p264 = scmp.le.s32.totalorder 1, %s19
      %p265 = scmp.lt.s32.totalorder %s19, 5
      %p266 = pnand %p264, %p265
      %p267 = pneg %p266
      // Predicated region
      $region41: #{tpu_custom_call.1} parent=5 // pred_check
        _
      $region42: #{tpu_custom_call.1} parent=5 // pred_check_branch
        %269 = sbr.rel (%p266) target = $region44
      $region43: #{tpu_custom_call.1} parent=5 // pred_region
        %s270 = ssub.s32 %s19, 1
        %s271 = sand.u32 %s46, 1
        %s272 = scalar_lea.sflag [#allocation4], %s271
        %s273 = sand.u32 %s46, 1
        %s274 = smul.addr %s273, 8
        %s275 = scalar_lea.vmem [#allocation3], %s274
        // Predicated region
        $region45: #{tpu_custom_call.1} parent=43 // pred_check
          %p276 = pneg %p59
        $region46: #{tpu_custom_call.1} parent=43 // pred_check_branch
          %278 = sbr.rel (%p276) target = $region48
        $region47: #{tpu_custom_call.1} parent=43 // pred_region
          %279 = dma.done %s272, 128
        $region48: #{tpu_custom_call.1} parent=43 // pred_fallthru
          _
        // Predicated region
        $region49: #{tpu_custom_call.1} parent=43 // pred_check
          %p280 = pneg %p80
        $region50: #{tpu_custom_call.1} parent=43 // pred_check_branch
          %282 = sbr.rel (%p280) target = $region52
        $region51: #{tpu_custom_call.1} parent=43 // pred_region
          %283 = dma.done [#allocation7], 2048
        $region52: #{tpu_custom_call.1} parent=43 // pred_fallthru
          _
        // Predicated region
        $region53: #{tpu_custom_call.1} parent=43 // pred_check
          %p284 = pneg %p122
        $region54: #{tpu_custom_call.1} parent=43 // pred_check_branch
          %286 = sbr.rel (%p284) target = $region56
        $region55: #{tpu_custom_call.1} parent=43 // pred_region
          %287 = dma.done [#allocation7], 2048
        $region56: #{tpu_custom_call.1} parent=43 // pred_fallthru
          _
        %s288 = sand.u32 %s46, 1
        %s289 = scalar_lea.sflag [#allocation4], %s288
        %s290 = sand.u32 %s46, 1
        %s291 = smul.addr %s290, 8
        %s292 = scalar_lea.vmem [#allocation3], %s291
        %p293 = pneg %p59
        %p294 = pneg %p56
        %p295 = pneg %p80
        %p296 = pneg %p77
        %p297 = pneg %p101
        %p298 = pneg %p98
        %p299 = pneg %p122
        %p300 = pneg %p119
        %p301 = pneg %p143
        %p302 = pneg %p140
        %p303 = pneg %p164
        %p304 = pneg %p161
        %p305 = pneg %p190
        %p306 = pneg %p187
        %s307 = sand.u32 %s177, 1
        %s308 = scalar_lea.sflag [#allocation5], %s307
        %s309 = sand.u32 %s177, 1
        %s310 = scalar_lea.vmem [#allocation9], %s309
        %p311 = scmp.eq.s32.totalorder %s29, 0
        // Predicated region
        $region57: #{tpu_custom_call.1} parent=43 // pred_check
          %p312 = pneg %p311
        $region58: #{tpu_custom_call.1} parent=43 // pred_check_branch
          %314 = sbr.rel (%p312) target = $region60
        $region59: #{tpu_custom_call.1} parent=43 // pred_region
          %315 = vst [vmem:[#allocation2] sm:$0x1] 0.0
        $region60: #{tpu_custom_call.1} parent=43 // pred_fallthru
          _
        %v316 = vld [vmem:[%s275] sm:$0xff]
        %v317 = vld [vmem:[#allocation6] sm:$0xff]
        %v318 = vld [vmem:[#allocation6 + $0x8] sm:$0xff]
        %v319 = vld [vmem:[#allocation6 + $0x10] sm:$0xff]
        %v320 = vld [vmem:[#allocation6 + $0x18] sm:$0xff]
        %v321 = vld [vmem:[#allocation6 + $0x20] sm:$0xff]
        %v322 = vld [vmem:[#allocation6 + $0x28] sm:$0xff]
        %v323 = vld [vmem:[#allocation6 + $0x30] sm:$0xff]
        %v324 = vld [vmem:[#allocation6 + $0x38] sm:$0xff]
        %v325 = vld [vmem:[#allocation6 + $0x40] sm:$0xff]
        %v326 = vld [vmem:[#allocation6 + $0x48] sm:$0xff]
        %v327 = vld [vmem:[#allocation6 + $0x50] sm:$0xff]
        %v328 = vld [vmem:[#allocation6 + $0x58] sm:$0xff]
        %v329 = vld [vmem:[#allocation6 + $0x60] sm:$0xff]
        %v330 = vld [vmem:[#allocation6 + $0x68] sm:$0xff]
        %v331 = vld [vmem:[#allocation6 + $0x70] sm:$0xff]
        %v332 = vld [vmem:[#allocation6 + $0x78] sm:$0xff]
        %v333 = vld [vmem:[%s2] sm:$0x1]
        %v335 = vlaneseq
        %v336 = vshrl.u32 %v335, 7
        %v337 = vsub.s32 0, %v336
        %v338 = vrot.slane %v333, %v337
        %340 = vmatprep.subr.mxu0 0.0
        %341 = vmatpush1.msra.mxu0 %v317
        %342 = vmatprep.subr.mxu0 0.0
        %343 = vmatpush1.msra.mxu0 %v318
        %344 = vmatprep.subr.mxu0 0.0
        %345 = vmatpush1.msra.mxu0 %v319
        %346 = vmatprep.subr.mxu0 0.0
        %347 = vmatpush1.msra.mxu0 %v320
        %348 = vmatprep.subr.mxu0 0.0
        %349 = vmatpush1.msra.mxu0 %v321
        %350 = vmatprep.subr.mxu0 0.0
        %351 = vmatpush1.msra.mxu0 %v322
        %352 = vmatprep.subr.mxu0 0.0
        %353 = vmatpush1.msra.mxu0 %v323
        %354 = vmatprep.subr.mxu0 0.0
        %355 = vmatpush1.msra.mxu0 %v324
        %356 = vmatprep.subr.mxu0 0.0
        %357 = vmatpush1.msra.mxu0 %v325
        %358 = vmatprep.subr.mxu0 0.0
        %359 = vmatpush1.msra.mxu0 %v326
        %360 = vmatprep.subr.mxu0 0.0
        %361 = vmatpush1.msra.mxu0 %v327
        %362 = vmatprep.subr.mxu0 0.0
        %363 = vmatpush1.msra.mxu0 %v328
        %364 = vmatprep.subr.mxu0 0.0
        %365 = vmatpush1.msra.mxu0 %v329
        %366 = vmatprep.subr.mxu0 0.0
        %367 = vmatpush1.msra.mxu0 %v330
        %368 = vmatprep.subr.mxu0 0.0
        %369 = vmatpush1.msra.mxu0 %v331
        %370 = vmatprep.subr.mxu0 0.0
        %371 = vmatpush1.msra.mxu0 %v332
        %372 = vmatprep.subr.mxu0 0.0
        %373 = vmatpush1.msra.mxu0 0.0
        %374 = vmatprep.subr.mxu0 0.0
        %375 = vmatpush1.msra.mxu0 0.0
        %376 = vmatprep.subr.mxu0 0.0
        %377 = vmatpush1.msra.mxu0 0.0
        %378 = vmatprep.subr.mxu0 0.0
        %379 = vmatpush1.msra.mxu0 0.0
        %380 = vmatprep.subr.mxu0 0.0
        %381 = vmatpush1.msra.mxu0 0.0
        %382 = vmatprep.subr.mxu0 0.0
        %383 = vmatpush1.msra.mxu0 0.0
        %384 = vmatprep.subr.mxu0 0.0
        %385 = vmatpush1.msra.mxu0 0.0
        %386 = vmatprep.subr.mxu0 0.0
        %387 = vmatpush1.msra.mxu0 0.0
        %388 = vmatprep.subr.mxu0 0.0
        %389 = vmatpush1.msra.mxu0 0.0
        %390 = vmatprep.subr.mxu0 0.0
        %391 = vmatpush1.msra.mxu0 0.0
        %392 = vmatprep.subr.mxu0 0.0
        %393 = vmatpush1.msra.mxu0 0.0
        %394 = vmatprep.subr.mxu0 0.0
        %395 = vmatpush1.msra.mxu0 0.0
        %396 = vmatprep.subr.mxu0 0.0
        %397 = vmatpush1.msra.mxu0 0.0
        %398 = vmatprep.subr.mxu0 0.0
        %399 = vmatpush1.msra.mxu0 0.0
        %400 = vmatprep.subr.mxu0 0.0
        %401 = vmatpush1.msra.mxu0 0.0
        %402 = vmatprep.subr.mxu0 0.0
        %403 = vmatpush1.msra.mxu0 0.0
        %404 = vmatprep.mubr.f32.mxu0 0.0
        %405 = vmatmul.mubr.f32.gmra.mrb[0].mxu0 %v316
        %v406 = vpop.f32.mrb[0].mxu0
        %v407 = vadd.f32 %v338, %v406
        %v408 = vpop.f32.mrb[0].mxu0
        %409 = vdwg.mxu0
        %v410 = vmax.f32 %v407, 0.0
        %v411 = vld [vmem:[#allocation8] sm:$0xff]
        %v412 = vld [vmem:[#allocation8 + $0x8] sm:$0xff]
        %v413 = vld [vmem:[#allocation8 + $0x10] sm:$0xff]
        %v414 = vld [vmem:[#allocation8 + $0x18] sm:$0xff]
        %v415 = vld [vmem:[#allocation8 + $0x20] sm:$0xff]
        %v416 = vld [vmem:[#allocation8 + $0x28] sm:$0xff]
        %v417 = vld [vmem:[#allocation8 + $0x30] sm:$0xff]
        %v418 = vld [vmem:[#allocation8 + $0x38] sm:$0xff]
        %v419 = vld [vmem:[#allocation8 + $0x40] sm:$0xff]
        %v420 = vld [vmem:[#allocation8 + $0x48] sm:$0xff]
        %v421 = vld [vmem:[#allocation8 + $0x50] sm:$0xff]
        %v422 = vld [vmem:[#allocation8 + $0x58] sm:$0xff]
        %v423 = vld [vmem:[#allocation8 + $0x60] sm:$0xff]
        %v424 = vld [vmem:[#allocation8 + $0x68] sm:$0xff]
        %v425 = vld [vmem:[#allocation8 + $0x70] sm:$0xff]
        %v426 = vld [vmem:[#allocation8 + $0x78] sm:$0xff]
        %v427 = vld [vmem:[%s4] sm:$0x1]
        %v429 = vlaneseq
        %v430 = vshrl.u32 %v429, 7
        %v431 = vsub.s32 0, %v430
        %v432 = vrot.slane %v427, %v431
        %434 = vmatprep.subr.mxu0 0.0
        %435 = vmatpush1.msra.mxu0 %v411
        %436 = vmatprep.subr.mxu0 0.0
        %437 = vmatpush1.msra.mxu0 %v412
        %438 = vmatprep.subr.mxu0 0.0
        %439 = vmatpush1.msra.mxu0 %v413
        %440 = vmatprep.subr.mxu0 0.0
        %441 = vmatpush1.msra.mxu0 %v414
        %442 = vmatprep.subr.mxu0 0.0
        %443 = vmatpush1.msra.mxu0 %v415
        %444 = vmatprep.subr.mxu0 0.0
        %445 = vmatpush1.msra.mxu0 %v416
        %446 = vmatprep.subr.mxu0 0.0
        %447 = vmatpush1.msra.mxu0 %v417
        %448 = vmatprep.subr.mxu0 0.0
        %449 = vmatpush1.msra.mxu0 %v418
        %450 = vmatprep.subr.mxu0 0.0
        %451 = vmatpush1.msra.mxu0 %v419
        %452 = vmatprep.subr.mxu0 0.0
        %453 = vmatpush1.msra.mxu0 %v420
        %454 = vmatprep.subr.mxu0 0.0
        %455 = vmatpush1.msra.mxu0 %v421
        %456 = vmatprep.subr.mxu0 0.0
        %457 = vmatpush1.msra.mxu0 %v422
        %458 = vmatprep.subr.mxu0 0.0
        %459 = vmatpush1.msra.mxu0 %v423
        %460 = vmatprep.subr.mxu0 0.0
        %461 = vmatpush1.msra.mxu0 %v424
        %462 = vmatprep.subr.mxu0 0.0
        %463 = vmatpush1.msra.mxu0 %v425
        %464 = vmatprep.subr.mxu0 0.0
        %465 = vmatpush1.msra.mxu0 %v426
        %466 = vmatprep.subr.mxu0 0.0
        %467 = vmatpush1.msra.mxu0 0.0
        %468 = vmatprep.subr.mxu0 0.0
        %469 = vmatpush1.msra.mxu0 0.0
        %470 = vmatprep.subr.mxu0 0.0
        %471 = vmatpush1.msra.mxu0 0.0
        %472 = vmatprep.subr.mxu0 0.0
        %473 = vmatpush1.msra.mxu0 0.0
        %474 = vmatprep.subr.mxu0 0.0
        %475 = vmatpush1.msra.mxu0 0.0
        %476 = vmatprep.subr.mxu0 0.0
        %477 = vmatpush1.msra.mxu0 0.0
        %478 = vmatprep.subr.mxu0 0.0
        %479 = vmatpush1.msra.mxu0 0.0
        %480 = vmatprep.subr.mxu0 0.0
        %481 = vmatpush1.msra.mxu0 0.0
        %482 = vmatprep.subr.mxu0 0.0
        %483 = vmatpush1.msra.mxu0 0.0
        %484 = vmatprep.subr.mxu0 0.0
        %485 = vmatpush1.msra.mxu0 0.0
        %486 = vmatprep.subr.mxu0 0.0
        %487 = vmatpush1.msra.mxu0 0.0
        %488 = vmatprep.subr.mxu0 0.0
        %489 = vmatpush1.msra.mxu0 0.0
        %490 = vmatprep.subr.mxu0 0.0
        %491 = vmatpush1.msra.mxu0 0.0
        %492 = vmatprep.subr.mxu0 0.0
        %493 = vmatpush1.msra.mxu0 0.0
        %494 = vmatprep.subr.mxu0 0.0
        %495 = vmatpush1.msra.mxu0 0.0
        %496 = vmatprep.subr.mxu0 0.0
        %497 = vmatpush1.msra.mxu0 0.0
        %498 = vmatprep.mubr.f32.mxu0 0.0
        %499 = vmatmul.mubr.f32.gmra.mrb[0].mxu0 %v410
        %v500 = vpop.f32.mrb[0].mxu0
        %v501 = vadd.f32 %v432, %v500
        %v502 = vpop.f32.mrb[0].mxu0
        %503 = vdwg.mxu0
        %v504 = vmax.f32 %v501, 0.0
        %v505 = vld [vmem:[#allocation2] sm:$0x1]
        %v506 = vrot.slane %v504, 4
        %v507 = vadd.f32 %v504, %v506
        %v508 = vrot.slane %v507, 2
        %v509 = vadd.f32 %v507, %v508
        %v510 = vrot.slane %v509, 1
        %v511 = vadd.f32 %v509, %v510
        %v512 = vadd.f32 %v505, %v511
        %513 = vst [vmem:[#allocation2] sm:$0x1] %v512
        %p514 = scmp.eq.s32.totalorder %s29, 1
        // Predicated region
        $region61: #{tpu_custom_call.1} parent=43 // pred_check
          %p515 = pneg %p514
        $region62: #{tpu_custom_call.1} parent=43 // pred_check_branch
          %517 = sbr.rel (%p515) target = $region64
        $region63: #{tpu_custom_call.1} parent=43 // pred_region
          %v518 = vld [vmem:[#allocation2] sm:$0x1]
          %v519 = vmul.f32 %v518, 0.0625
          %v520 = vld [vmem:[%s5] sm:$0x1]
          %v521 = vmul.f32 %v519, %v520
          %vm522 = vcmask 1040384
          %v523 = vsel %vm522, %v521, 0.0
          %524 = vadd.xlane.f32.xlu0 %v523
          %v525 = vpop.xlane.xlu0 %524
          %526 = vst [vmem:[%s310] sm:$0x1] %v525
        $region64: #{tpu_custom_call.1} parent=43 // pred_fallthru
          _
        %s527 = sand.u32 %s177, 1
        %s528 = scalar_lea.sflag [#allocation5], %s527
        %s529 = sand.u32 %s177, 1
        %s530 = scalar_lea.vmem [#allocation9], %s529
        // Predicated region
        $region65: #{tpu_custom_call.1} parent=43 // pred_check
          %p531 = pneg %p187
        $region66: #{tpu_custom_call.1} parent=43 // pred_check_branch
          %533 = sbr.rel (%p531) target = $region68
        $region67: #{tpu_custom_call.1} parent=43 // pred_region
          %s535 = ssub.s32 16, 16
          %536 = vsyncadd %s528, %s535
          %s537 = smul.addr %s28, 16
          %s538 = scalar_lea.hbm %s6, %s537
          %s540 = sshll.u32 %s530, 4
          %s541 = int_to_ptr.vmem [resolvable:$true] %s540
          %543 = dma.vmem_to_hbm [thread:$0]  %s541, 16, %s538, %s528
        $region68: #{tpu_custom_call.1} parent=43 // pred_fallthru
          _
      $region44: #{tpu_custom_call.1} parent=5 // pred_fallthru
        _
      %p544 = scmp.le.s32.totalorder 2, %s19
      // Predicated region
      $region69: #{tpu_custom_call.1} parent=5 // pred_check
        %p545 = pneg %p544
      $region70: #{tpu_custom_call.1} parent=5 // pred_check_branch
        %547 = sbr.rel (%p545) target = $region72
      $region71: #{tpu_custom_call.1} parent=5 // pred_region
        %s548 = ssub.s32 %s19, 2
        // Predicated region
        $region73: #{tpu_custom_call.1} parent=71 // pred_check
          %p549 = pneg %p193
        $region74: #{tpu_custom_call.1} parent=71 // pred_check_branch
          %551 = sbr.rel (%p549) target = $region76
        $region75: #{tpu_custom_call.1} parent=71 // pred_region
          %s552 = sand.u32 %s178, 1
          %s553 = scalar_lea.sflag [#allocation5], %s552
          %s554 = sand.u32 %s178, 1
          %s555 = scalar_lea.vmem [#allocation9], %s554
          %556 = dma.done %s553, 16
        $region76: #{tpu_custom_call.1} parent=71 // pred_fallthru
          _
      $region72: #{tpu_custom_call.1} parent=5 // pred_fallthru
        _
    $region6: #{tpu_custom_call.1} parent=1 // loop_footer
      %s23 = sadd.s32 1, %s19
    $region7: #{tpu_custom_call.1} parent=1 // loop_footer_branch
      %18 = sbr.rel target = $region3
    $region8: #{tpu_custom_call.1} parent=1 // loop_exit
      _
    %557 = vsyncpa [#allocation4], 1
    %s558 = scalar_lea.sflag [#allocation4], 1
    %559 = vsyncpa %s558, 1
    %560 = vsyncpa [#allocation7], 1
    %561 = vsyncpa [#allocation5], 1
    %s562 = scalar_lea.sflag [#allocation5], 1
    %563 = vsyncpa %s562, 1

</llo_original>
